<compile_context>
chip_gen: v7x
topology: tpu7x:2x2x1
jax: 0.10.0
libtpu: 0.0.40
codegen_flags: <defaults>
</compile_context>

<pallas_src>
import jax
import jax.numpy as jnp
from jax.experimental import pallas as pl
from jax.experimental.pallas import tpu as pltpu


def _round_up(x, m):
    return ((x + m - 1) // m) * m


def _round_down(x, m):
    return (x // m) * m


def _vmem_capacity_bytes():
    """Physical VMEM per TensorCore; conservative fallback if query fails."""
    try:
        info = pltpu.get_tpu_info()
        cap = int(getattr(info, "vmem_capacity_bytes", 0))
        if cap > 0:
            return cap
    except Exception:
        pass
    return 64 << 20  # v7x physical VMEM (smallest of the listed generations)


def _linear_kernel(x_ref, wt_ref, b_ref, o_ref):
    # x_ref : (tm, K)  input row tile, natural layout (big tile never transposed)
    # wt_ref: (K, N)   weight^T (canonical MXU stationary operand, VMEM resident)
    # b_ref : (1, N)   bias row, f32
    # o_ref : (tm, N)  output row tile
    acc = jnp.dot(x_ref[...], wt_ref[...], preferred_element_type=jnp.float32)
    o_ref[...] = (acc + b_ref[...]).astype(o_ref.dtype)


def aspect_sa_output_forward(x, weight, bias, num_categories, num_labels, *, tm=None):
    """
    x       : (batch, seq, d_input)        -- f32 or bf16
    weight  : (d_output*num_categories, d_input)   -- PyTorch nn.Linear layout
    bias    : (d_output*num_categories,)
    returns : (batch*seq, num_categories, num_labels), dtype of x
    """
    B, S, K = x.shape
    N = weight.shape[0]
    if N != num_categories * num_labels:
        raise ValueError(
            f"weight.shape[0]={N} must equal num_categories*num_labels="
            f"{num_categories * num_labels}")
    if bias.shape != (N,):
        raise ValueError(f"bias must have shape ({N},), got {bias.shape}")

    M = B * S
    x2d = x.reshape(M, K)
    # Tiny one-off transpose/cast of the weight (K*N elements) so the kernel's
    # matmul is the canonical (tm,K)@(K,N) form; bias kept f32 for the accumulate.
    wt = weight.T.astype(x.dtype)
    b_row = bias.reshape(1, N).astype(jnp.float32)

    x_item = jnp.dtype(x.dtype).itemsize
    row_align = 8 if x_item >= 4 else (32 // x_item)   # sublane packing (bf16: 16)
    phys_vmem = _vmem_capacity_bytes()

    if tm is None:
        # v5e/v6e (128 MiB VMEM) can take bigger tiles; v7x (64 MiB) stays at 2048.
        tm = 4096 if phys_vmem >= (96 << 20) else 2048

    # --- choose the row tile ---------------------------------------------
    # Cap by VMEM: 3-deep x buffers + double-buffered output + resident weight.
    budget = int(0.7 * phys_vmem)
    w_bytes = K * N * x_item + N * 4
    per_row_bytes = (3 * K + 2 * N) * x_item
    tm_cap = max(128, _round_down(max(budget - w_bytes, 0) // per_row_bytes, 128))
    tm_eff = min(tm, tm_cap)
    # Keep >= 2 grid steps when M is large enough (megacore sharding on v7x).
    tm_eff = min(tm_eff, max(_round_up(pl.cdiv(M, 2), 128), 128))
    # Never larger than one (alignment-rounded) copy of all the rows.
    tm_eff = min(tm_eff, _round_up(M, row_align))
    tm_eff = max(_round_up(tm_eff, row_align), row_align)

    grid_m = pl.cdiv(M, tm_eff)

    # Deeper x pipeline only pays off on longer grids.
    if grid_m >= 3:
        x_spec = pl.BlockSpec((tm_eff, K), lambda i: (i, 0),
                              pipeline_mode=pl.Buffered(3))
        n_xbuf = 3
    else:
        x_spec = pl.BlockSpec((tm_eff, K), lambda i: (i, 0))
        n_xbuf = 2

    # VMEM limit computed from the actual buffers (+25% slack), under physical.
    buf_bytes = (n_xbuf * tm_eff * K + 2 * tm_eff * N) * x_item + w_bytes
    vmem_limit = max(int(buf_bytes * 1.25) + (8 << 20), 32 << 20)
    vmem_limit = int(min(vmem_limit, phys_vmem - (8 << 20), 112 << 20))

    cost = pl.CostEstimate(
        flops=2 * M * K * N,
        transcendentals=0,
        bytes_accessed=x_item * (M * K + K * N + M * N) + 4 * N,
    )

    out2d = pl.pallas_call(
        _linear_kernel,
        out_shape=jax.ShapeDtypeStruct((M, N), x.dtype),
        grid_spec=pltpu.PrefetchScalarGridSpec(
            num_scalar_prefetch=0,
            grid=(grid_m,),
            in_specs=[
                x_spec,                                    # streamed x row tiles
                pl.BlockSpec((K, N), lambda i: (0, 0)),    # resident weight^T
                pl.BlockSpec((1, N), lambda i: (0, 0)),    # resident bias
            ],
            out_specs=pl.BlockSpec((tm_eff, N), lambda i: (i, 0)),
        ),
        compiler_params=pltpu.CompilerParams(
            dimension_semantics=("parallel",),   # row tiles independent
            vmem_limit_bytes=vmem_limit,
        ),
        cost_estimate=cost,
    )(x2d, wt, b_row)

    # Pure metadata reshape — matches the module's .view(-1, cats, labels).
    return out2d.reshape(-1, num_categories, num_labels)


def _reference(x, weight, bias, num_categories, num_labels):
    d_input = x.shape[-1]
    xf = x.astype(jnp.float32).reshape(-1, d_input)
    return (xf @ weight.T + bias).reshape(-1, num_categories, num_labels)


if __name__ == "__main__":
    key = jax.random.PRNGKey(0)

    # Config 1: shapes consistent with the module (batch=2, seq=8, d_input=32,
    #           d_output=4 labels, 4 categories).
    # Config 2: M=batch*seq not a multiple of the tile -> partial last block path.
    # Config 3: bf16 activation path (f32 accumulate inside the kernel).
    configs = [
        dict(batch=2, seq=8, d_input=32, d_output=4, num_categories=4,
             dtype=jnp.float32, atol=1e-5),
        dict(batch=3, seq=5, d_input=32, d_output=4, num_categories=4,
             dtype=jnp.float32, atol=1e-5),
        dict(batch=2, seq=8, d_input=32, d_output=4, num_categories=4,
             dtype=jnp.bfloat16, atol=5e-2),
    ]

    for cfg in configs:
        batch, seq = cfg["batch"], cfg["seq"]
        d_input, d_output, num_categories = (
            cfg["d_input"], cfg["d_output"], cfg["num_categories"])
        d_out_total = d_output * num_categories

        key, kx, kw, kb = jax.random.split(key, 4)
        bound = 1.0 / (d_input ** 0.5)
        weight = jax.random.uniform(
            kw, (d_out_total, d_input), jnp.float32, -bound, bound)
        bias = jax.random.uniform(kb, (d_out_total,), jnp.float32, -bound, bound)
        x = jax.random.normal(kx, (batch, seq, d_input), jnp.float32).astype(cfg["dtype"])

        out = aspect_sa_output_forward(x, weight, bias, num_categories, d_output)
        out = jax.block_until_ready(out)

        ref = _reference(x, weight, bias, num_categories, d_output)
        assert out.shape == (batch * seq, num_categories, d_output), out.shape
        assert jnp.allclose(out.astype(jnp.float32), ref,
                            atol=cfg["atol"], rtol=cfg["atol"]), (
            f"mismatch for config {cfg}")

    print("KERNEL_OK")
</pallas_src>

<mosaic_0001>
module attributes {stable_mosaic.version = 11 : i64} {
  func.func @_linear_kernel(%arg0: i32, %arg1: memref<16x32xf32, #tpu.memory_space<vmem>>, %arg2: memref<32x16xf32, #tpu.memory_space<vmem>>, %arg3: memref<1x16xf32, #tpu.memory_space<vmem>>, %arg4: memref<16x16xf32, #tpu.memory_space<vmem>>) attributes {dimension_semantics = [#tpu.dimension_semantics<parallel>], iteration_bounds = array<i64: 1>, scalar_prefetch = 0 : i64, scratch_operands = 0 : i64, tpu.core_type = #tpu.core_type<tc>, window_params = [{transform_indices = @transform_0, window_bounds = array<i64: 16, 32>}, {pipeline_mode = #tpu.pipeline_mode<synchronous>, transform_indices = @transform_1, window_bounds = array<i64: 32, 16>}, {pipeline_mode = #tpu.pipeline_mode<synchronous>, transform_indices = @transform_2, window_bounds = array<i64: 1, 16>}, {transform_indices = @transform_3, window_bounds = array<i64: 16, 16>}]} {
    %c0 = arith.constant 0 : index
    %c0_0 = arith.constant 0 : index
    %0 = vector.load %arg1[%c0, %c0_0] : memref<16x32xf32, #tpu.memory_space<vmem>>, vector<16x32xf32>
    %c0_1 = arith.constant 0 : index
    %c0_2 = arith.constant 0 : index
    %1 = vector.load %arg2[%c0_1, %c0_2] : memref<32x16xf32, #tpu.memory_space<vmem>>, vector<32x16xf32>
    %cst = arith.constant dense<0.000000e+00> : vector<16x16xf32>
    %2 = tpu.matmul %0, %1, %cst {dimension_numbers = #tpu.dot_dimension_numbers<[1], [0], [0], [1], [0, 0, 1, 1], [], []>} : vector<16x32xf32>, vector<32x16xf32>, vector<16x16xf32> -> vector<16x16xf32>
    %c0_3 = arith.constant 0 : index
    %c0_4 = arith.constant 0 : index
    %3 = vector.load %arg3[%c0_3, %c0_4] : memref<1x16xf32, #tpu.memory_space<vmem>>, vector<1x16xf32>
    %4 = vector.broadcast %3 : vector<1x16xf32> to vector<16x16xf32>
    %5 = arith.addf %2, %4 : vector<16x16xf32>
    %c0_5 = arith.constant 0 : index
    %c0_6 = arith.constant 0 : index
    %6 = vector.load %arg4[%c0_5, %c0_6] : memref<16x16xf32, #tpu.memory_space<vmem>>, vector<16x16xf32>
    tpu.vector_store %arg4[%c0_5, %c0_6], %5 {strides = array<i32>} : memref<16x16xf32, #tpu.memory_space<vmem>>, vector<16x16xf32>,
    return
  }
  func.func @transform_0(%arg0: i32) -> (i32, i32) {
    %c0_i32 = arith.constant 0 : i32
    %c0_i32_0 = arith.constant 0 : i32
    return %arg0, %c0_i32 : i32, i32
  }
  func.func @transform_1(%arg0: i32) -> (i32, i32) {
    %c0_i32 = arith.constant 0 : i32
    %c0_i32_0 = arith.constant 0 : i32
    %c0_i32_1 = arith.constant 0 : i32
    return %c0_i32, %c0_i32_0 : i32, i32
  }
  func.func @transform_2(%arg0: i32) -> (i32, i32) {
    %c0_i32 = arith.constant 0 : i32
    %c0_i32_0 = arith.constant 0 : i32
    %c0_i32_1 = arith.constant 0 : i32
    return %c0_i32, %c0_i32_0 : i32, i32
  }
  func.func @transform_3(%arg0: i32) -> (i32, i32) {
    %c0_i32 = arith.constant 0 : i32
    %c0_i32_0 = arith.constant 0 : i32
    return %arg0, %c0_i32 : i32, i32
  }
}

</mosaic_0001>

<llo_original>
// kernel: tpu_custom_call.1
$region0: #{tpu_custom_call.1}
  #allocation0 [shape = 'u32[]', space=smem, size = 0x4, offset = 0x4, fixed_abs, tag = 'smem constant byte address 0x4 - core index']
  #allocation1 [shape = 'u32[144,128]{1,0:T(1,128)}', space=vmem, size = 0x12000, scoped, tag = 'internal scratch']
  %s0 = inlined_call_operand.vmem [shape: f32[16,32], index: 0, kind: input, shape index: {}]
  %s1 = inlined_call_operand.vmem [shape: f32[32,16], index: 1, kind: input, shape index: {}]
  %s2 = inlined_call_operand.vmem [shape: f32[1,16], index: 2, kind: input, shape index: {}]
  %s3 = inlined_call_operand.hbm [shape: f32[16,16], index: 3, kind: output, shape index: {}]
  %s4 = sld [smem:[#allocation0]]
  $region22: #{tpu_custom_call.1} parent=0
    _
  %s6 = ssub.s32 1, %s4
  %s7 = scalar_select 0, %s6, %s4
  $region1: #{tpu_custom_call.1} parent=0
    #allocation2 [shape = 'u8[8192]{0}', space=vmem, size = 0x2000, scoped, tag = 'output window, operand 0, single buffered']
    #allocation3 [shape = 's32[1]{0}', space=sflag, size = 0x4, scoped, tag = 'scoped memory for tpu_custom_call.1']
    %8 = vsyncpa [#allocation3], 0
    // Predicated region
    $region2: #{tpu_custom_call.1} parent=1 // pred_check
      _
    $region3: #{tpu_custom_call.1} parent=1 // pred_check_branch
      %10 = sbr.rel (0) target = $region5
    $region4: #{tpu_custom_call.1} parent=1 // pred_region
      _
    $region5: #{tpu_custom_call.1} parent=1 // pred_fallthru
      _
    // Predicated region
    $region6: #{tpu_custom_call.1} parent=1 // pred_check
      _
    $region7: #{tpu_custom_call.1} parent=1 // pred_check_branch
      %12 = sbr.rel (0) target = $region9
    $region8: #{tpu_custom_call.1} parent=1 // pred_region
      _
    $region9: #{tpu_custom_call.1} parent=1 // pred_fallthru
      _
    // Predicated region
    $region10: #{tpu_custom_call.1} parent=1 // pred_check
      _
    $region11: #{tpu_custom_call.1} parent=1 // pred_check_branch
      %14 = sbr.rel (0) target = $region13
    $region12: #{tpu_custom_call.1} parent=1 // pred_region
      _
    $region13: #{tpu_custom_call.1} parent=1 // pred_fallthru
      _
    %v15 = vld [vmem:[%s0] sm:$0xff]
    %v16 = vld [vmem:[%s0 + $0x8] sm:$0xff]
    %v17 = vld [vmem:[%s1] sm:$0xff]
    %v18 = vld [vmem:[%s1 + $0x8] sm:$0xff]
    %v19 = vld [vmem:[%s1 + $0x10] sm:$0xff]
    %v20 = vld [vmem:[%s1 + $0x18] sm:$0xff]
    %v21 = vld [vmem:[%s2] sm:$0x1]
    %v23 = vlaneseq
    %v24 = vshrl.u32 %v23, 7
    %v25 = vsub.s32 0, %v24
    %v26 = vrot.slane %v21, %v25
    %vm28 = vcmask 261120
    %v30 = vsel %vm28, %v15, 0
    %v33 = vsel %vm28, %v16, 0
    %35 = vmatprep.subr.mxu0 0.0
    %36 = vmatpush1.msra.mxu0 %v17
    %37 = vmatprep.subr.mxu0 0.0
    %38 = vmatpush1.msra.mxu0 %v18
    %39 = vmatprep.subr.mxu0 0.0
    %40 = vmatpush1.msra.mxu0 %v19
    %41 = vmatprep.subr.mxu0 0.0
    %42 = vmatpush1.msra.mxu0 %v20
    %43 = vmatprep.subr.mxu0 0.0
    %44 = vmatpush1.msra.mxu0 0.0
    %45 = vmatprep.subr.mxu0 0.0
    %46 = vmatpush1.msra.mxu0 0.0
    %47 = vmatprep.subr.mxu0 0.0
    %48 = vmatpush1.msra.mxu0 0.0
    %49 = vmatprep.subr.mxu0 0.0
    %50 = vmatpush1.msra.mxu0 0.0
    %51 = vmatprep.subr.mxu0 0.0
    %52 = vmatpush1.msra.mxu0 0.0
    %53 = vmatprep.subr.mxu0 0.0
    %54 = vmatpush1.msra.mxu0 0.0
    %55 = vmatprep.subr.mxu0 0.0
    %56 = vmatpush1.msra.mxu0 0.0
    %57 = vmatprep.subr.mxu0 0.0
    %58 = vmatpush1.msra.mxu0 0.0
    %59 = vmatprep.subr.mxu0 0.0
    %60 = vmatpush1.msra.mxu0 0.0
    %61 = vmatprep.subr.mxu0 0.0
    %62 = vmatpush1.msra.mxu0 0.0
    %63 = vmatprep.subr.mxu0 0.0
    %64 = vmatpush1.msra.mxu0 0.0
    %65 = vmatprep.subr.mxu0 0.0
    %66 = vmatpush1.msra.mxu0 0.0
    %67 = vmatprep.subr.mxu0 0.0
    %68 = vmatpush1.msra.mxu0 0.0
    %69 = vmatprep.subr.mxu0 0.0
    %70 = vmatpush1.msra.mxu0 0.0
    %71 = vmatprep.subr.mxu0 0.0
    %72 = vmatpush1.msra.mxu0 0.0
    %73 = vmatprep.subr.mxu0 0.0
    %74 = vmatpush1.msra.mxu0 0.0
    %75 = vmatprep.subr.mxu0 0.0
    %76 = vmatpush1.msra.mxu0 0.0
    %77 = vmatprep.subr.mxu0 0.0
    %78 = vmatpush1.msra.mxu0 0.0
    %79 = vmatprep.subr.mxu0 0.0
    %80 = vmatpush1.msra.mxu0 0.0
    %81 = vmatprep.subr.mxu0 0.0
    %82 = vmatpush1.msra.mxu0 0.0
    %83 = vmatprep.subr.mxu0 0.0
    %84 = vmatpush1.msra.mxu0 0.0
    %85 = vmatprep.subr.mxu0 0.0
    %86 = vmatpush1.msra.mxu0 0.0
    %87 = vmatprep.subr.mxu0 0.0
    %88 = vmatpush1.msra.mxu0 0.0
    %89 = vmatprep.subr.mxu0 0.0
    %90 = vmatpush1.msra.mxu0 0.0
    %91 = vmatprep.subr.mxu0 0.0
    %92 = vmatpush1.msra.mxu0 0.0
    %93 = vmatprep.subr.mxu0 0.0
    %94 = vmatpush1.msra.mxu0 0.0
    %95 = vmatprep.subr.mxu0 0.0
    %96 = vmatpush1.msra.mxu0 0.0
    %97 = vmatprep.subr.mxu0 0.0
    %98 = vmatpush1.msra.mxu0 0.0
    %99 = vmatprep.mubr.f32.mxu0 0.0
    %100 = vmatmul.mubr.f32.gmra.mrb[0].mxu0 %v30
    %v101 = vpop.f32.mrb[0].mxu0
    %v102 = vadd.f32 %v26, %v101
    %v103 = vpop.f32.mrb[0].mxu0
    %104 = vmatprep.mubr.f32.mxu0 0.0
    %105 = vmatmul.mubr.f32.gmra.mrb[0].mxu0 %v33
    %v106 = vpop.f32.mrb[0].mxu0
    %v107 = vadd.f32 %v26, %v106
    %v108 = vpop.f32.mrb[0].mxu0
    %109 = vdwg.mxu0
    %vm110 = vcmask 130048
    %111 = vst.msk [vmem:[#allocation2] sm:$0xff] %vm110, %v102
    %112 = vst.msk [vmem:[#allocation2 + $0x8] sm:$0xff] %vm110, %v107
    // Predicated region
    $region14: #{tpu_custom_call.1} parent=1 // pred_check
      _
    $region15: #{tpu_custom_call.1} parent=1 // pred_check_branch
      %114 = sbr.rel (0) target = $region17
    $region16: #{tpu_custom_call.1} parent=1 // pred_region
      %s116 = ssub.s32 256, 256
      %117 = vsyncadd [#allocation3], %s116
      %s118 = sshll.u32 [#allocation2], 4
      %s119 = int_to_ptr.vmem [resolvable:$true] %s118
      %124 = dma.vmem_to_hbm [thread:$0]  %s119, 256, %s3, [#allocation3], 128, 128, 8
    $region17: #{tpu_custom_call.1} parent=1 // pred_fallthru
      _
    // Predicated region
    $region18: #{tpu_custom_call.1} parent=1 // pred_check
      _
    $region19: #{tpu_custom_call.1} parent=1 // pred_check_branch
      %126 = sbr.rel (0) target = $region21
    $region20: #{tpu_custom_call.1} parent=1 // pred_region
      %127 = dma.done [#allocation3], 256
    $region21: #{tpu_custom_call.1} parent=1 // pred_fallthru
      _
    %128 = vsyncpa [#allocation3], 1

</llo_original>
